<compile_context>
chip_gen: v6e
topology: v6e:2x2x1
jax: 0.10.0
libtpu: 0.0.40
codegen_flags: <defaults>
</compile_context>

<pallas_src>
import functools
import math

import jax
import jax.numpy as jnp
from jax.experimental import pallas as pl
from jax.experimental.pallas import tpu as pltpu


def _round_up(x, m):
    return ((x + m - 1) // m) * m


# VMEM budget the tiles are sized against. Leaves headroom under the 32 MiB
# default scoped limit that applies on every generation (v7x physical is
# only 64 MiB), so no vmem_limit_bytes override is needed.
_VMEM_BUDGET = 24 * 1024 * 1024


def _tile_targets():
    """Per-generation tile targets for the adjacency aggregation kernels."""
    kind = ""
    try:
        kind = jax.devices()[0].device_kind.lower()
    except Exception:
        pass
    if "v7" in kind:
        # v7x: 64 MiB physical / 32 MiB default scoped VMEM -> tighter tiles.
        return 256, 1024
    # v5e / v6e: 128 MiB VMEM; the bigger node tile halves the number of grid
    # steps and amortizes the ~0.35us per-step pipeline overhead.
    return 512, 2048


def _vmem_estimate(tm, tk, f_pad, h_pad, c_pad):
    """Worst-case VMEM bytes across the three pallas_calls
    (double-buffered bf16 inputs/outputs + f32 accumulator scratch)."""
    k1 = (2 * tm * f_pad * 2      # x tile
          + 2 * f_pad * h_pad * 2  # resident W1
          + 2 * tm * h_pad * 2)    # support1 output tile
    k2 = (2 * tm * tk * 2          # adj tile
          + 2 * tk * h_pad * 2     # support1 K-tile
          + 2 * h_pad * c_pad * 2  # resident W2
          + 2 * h_pad * 4          # b1
          + tm * h_pad * 4         # accumulator scratch
          + 2 * tm * c_pad * 2)    # support2 output tile
    k3 = (2 * tm * tk * 2          # adj tile
          + 2 * tk * c_pad * 2     # support2 K-tile
          + 2 * c_pad * 4          # b2
          + tm * c_pad * 4         # accumulator scratch
          + 2 * tm * c_pad * 4)    # f32 output tile
    return max(k1, k2, k3)


def _fit_tiles(tm_t, tk_t, f_pad, h_pad, c_pad):
    """Shrink tile targets until the worst-case VMEM estimate fits the budget.
    Keeps tk a multiple of tm so n_pad stays divisible by both."""
    while (_vmem_estimate(tm_t, tk_t, f_pad, h_pad, c_pad) > _VMEM_BUDGET
           and tk_t > tm_t):
        tk_t //= 2
    while (_vmem_estimate(tm_t, tk_t, f_pad, h_pad, c_pad) > _VMEM_BUDGET
           and tm_t > 128):
        tm_t //= 2
        tk_t = max(tk_t, tm_t)
    return tm_t, tk_t


def _choose_tiling(n, tm_t, tk_t):
    """Pick (n_pad, tm, tk) with tm | tk | n_pad and n_pad a multiple of 8."""
    if n <= tm_t:
        n_pad = _round_up(max(n, 8), 8)
        return n_pad, n_pad, n_pad
    if n <= tk_t:
        n_pad = _round_up(n, tm_t)
        return n_pad, tm_t, n_pad
    n_pad = _round_up(n, tk_t)
    return n_pad, tm_t, tk_t


# ---------------------------------------------------------------------------
# Kernel 1:  support1 = X @ W1          (row-tiled over nodes, W1 resident)
# ---------------------------------------------------------------------------
def support1_kernel(x_ref, w1_ref, s1_ref):
    s1_ref[...] = jnp.dot(x_ref[...], w1_ref[...],
                          preferred_element_type=jnp.float32
                          ).astype(s1_ref.dtype)


# ---------------------------------------------------------------------------
# Kernel 2:  acc += adj(i,k) @ support1(k)   (K-tiled contraction)
#            on last k:  h = relu(acc + b1);  support2(i) = h @ W2
# (layer-1 aggregation fused with layer-2 support so h never hits HBM)
# ---------------------------------------------------------------------------
def layer1_kernel(adj_ref, s1_ref, b1_ref, w2_ref, s2_ref, acc_ref):
    @pl.when(pl.program_id(1) == 0)
    def _init():
        acc_ref[...] = jnp.zeros_like(acc_ref)

    acc_ref[...] += jnp.dot(adj_ref[...], s1_ref[...],
                            preferred_element_type=jnp.float32)

    @pl.when(pl.program_id(1) == pl.num_programs(1) - 1)
    def _finalize():
        h = jnp.maximum(acc_ref[...] + b1_ref[...], 0.0)
        # TODO(synk): training-mode dropout (pltpu.prng_random_bits) omitted;
        # eval mode F.dropout(..., training=False) is an identity.
        s2_ref[...] = jnp.dot(h.astype(w2_ref.dtype), w2_ref[...],
                              preferred_element_type=jnp.float32
                              ).astype(s2_ref.dtype)


# ---------------------------------------------------------------------------
# Kernel 3:  acc += adj(i,k) @ support2(k)   (K-tiled contraction)
#            on last k:  out(i) = log_softmax(acc + b2)   (class axis)
# ---------------------------------------------------------------------------
def layer2_kernel(adj_ref, s2_ref, b2_ref, out_ref, acc_ref, *, nclass):
    @pl.when(pl.program_id(1) == 0)
    def _init():
        acc_ref[...] = jnp.zeros_like(acc_ref)

    acc_ref[...] += jnp.dot(adj_ref[...], s2_ref[...],
                            preferred_element_type=jnp.float32)

    @pl.when(pl.program_id(1) == pl.num_programs(1) - 1)
    def _finalize():
        logits = acc_ref[...] + b2_ref[...]
        # Mask the lane-padding class columns so they cannot perturb softmax.
        col = jax.lax.broadcasted_iota(jnp.int32, logits.shape, 1)
        logits = jnp.where(col < nclass, logits, -1e30)
        m = jnp.max(logits, axis=-1, keepdims=True)
        z = logits - m
        lse = jnp.log(jnp.sum(jnp.exp(z), axis=-1, keepdims=True))
        out_ref[...] = z - lse


# ---------------------------------------------------------------------------
# One-time preparation (hoisted out of the per-call path): padding and the
# O(N^2) f32 -> bf16 cast of adj are comparable HBM traffic to the kernels
# themselves, so never pay them per forward on a fixed graph.
# ---------------------------------------------------------------------------
def gcn_prepare(x, adj, w1, b1, w2, b2):
    n, nfeat = x.shape
    nhid = w1.shape[1]
    nclass = w2.shape[1]

    f_pad = _round_up(nfeat, 128)
    h_pad = _round_up(nhid, 128)
    c_pad = _round_up(nclass, 128)

    tm_t, tk_t = _tile_targets()
    tm_t, tk_t = _fit_tiles(tm_t, tk_t, f_pad, h_pad, c_pad)
    n_pad, tm, tk = _choose_tiling(n, tm_t, tk_t)

    pad2 = lambda a, r, c: jnp.pad(a, ((0, r - a.shape[0]),
                                       (0, c - a.shape[1])))

    return dict(
        x_p=pad2(x, n_pad, f_pad).astype(jnp.bfloat16),
        adj_p=pad2(adj, n_pad, n_pad).astype(jnp.bfloat16),
        w1_p=pad2(w1, f_pad, h_pad).astype(jnp.bfloat16),
        w2_p=pad2(w2, h_pad, c_pad).astype(jnp.bfloat16),
        b1_p=pad2(b1.reshape(1, -1), 1, h_pad).astype(jnp.float32),
        b2_p=pad2(b2.reshape(1, -1), 1, c_pad).astype(jnp.float32),
        n=n, nclass=nclass, tm=tm, tk=tk,
    )


@functools.partial(jax.jit, static_argnames=("tm", "tk", "nclass"))
def gcn_forward_prepared(x_p, adj_p, w1_p, b1_p, w2_p, b2_p, *, tm, tk, nclass):
    n_pad, f_pad = x_p.shape
    h_pad = w1_p.shape[1]
    c_pad = w2_p.shape[1]
    gm, gk = n_pad // tm, n_pad // tk

    row = lambda cols: pl.BlockSpec((tm, cols), lambda i, k: (i, 0))
    ktile = lambda cols: pl.BlockSpec((tk, cols), lambda i, k: (k, 0))
    const = lambda shape: pl.BlockSpec(shape, lambda i, k: (0,) * len(shape))

    sem2 = pltpu.CompilerParams(
        dimension_semantics=("parallel", "arbitrary"))

    # ---- support1 = X @ W1  (row-tiled, W1 resident) -------------------------
    # TODO(synk): for very large nfeat this matmul could be K-tiled over the
    # feature axis too; the adjacency kernels below dominate for GCN datasets.
    support1 = pl.pallas_call(
        support1_kernel,
        out_shape=jax.ShapeDtypeStruct((n_pad, h_pad), jnp.bfloat16),
        grid=(gm,),
        in_specs=[pl.BlockSpec((tm, f_pad), lambda i: (i, 0)),
                  pl.BlockSpec((f_pad, h_pad), lambda i: (0, 0))],
        out_specs=pl.BlockSpec((tm, h_pad), lambda i: (i, 0)),
        compiler_params=pltpu.CompilerParams(
            dimension_semantics=("parallel",)),
    )(x_p, w1_p)

    # ---- h = relu(adj @ support1 + b1);  support2 = h @ W2  (K-tiled) --------
    support2 = pl.pallas_call(
        layer1_kernel,
        out_shape=jax.ShapeDtypeStruct((n_pad, c_pad), jnp.bfloat16),
        grid=(gm, gk),
        in_specs=[pl.BlockSpec((tm, tk), lambda i, k: (i, k)),
                  ktile(h_pad),
                  const((1, h_pad)),
                  const((h_pad, c_pad))],
        out_specs=row(c_pad),
        scratch_shapes=[pltpu.VMEM((tm, h_pad), jnp.float32)],
        compiler_params=sem2,
    )(adj_p, support1, b1_p, w2_p)

    # ---- out = log_softmax(adj @ support2 + b2)  (K-tiled) -------------------
    out_padded = pl.pallas_call(
        functools.partial(layer2_kernel, nclass=nclass),
        out_shape=jax.ShapeDtypeStruct((n_pad, c_pad), jnp.float32),
        grid=(gm, gk),
        in_specs=[pl.BlockSpec((tm, tk), lambda i, k: (i, k)),
                  ktile(c_pad),
                  const((1, c_pad))],
        out_specs=row(c_pad),
        scratch_shapes=[pltpu.VMEM((tm, c_pad), jnp.float32)],
        compiler_params=sem2,
    )(adj_p, support2, b2_p)

    return out_padded


def gcn_forward(x, adj, w1, b1, w2, b2):
    """Convenience wrapper: prepare (once) + run + slice off padding."""
    prep = gcn_prepare(x, adj, w1, b1, w2, b2)
    out_p = gcn_forward_prepared(
        prep["x_p"], prep["adj_p"], prep["w1_p"], prep["b1_p"],
        prep["w2_p"], prep["b2_p"],
        tm=prep["tm"], tk=prep["tk"], nclass=prep["nclass"])
    return out_p[:prep["n"], :prep["nclass"]]


def gcn_reference(x, adj, w1, b1, w2, b2):
    """Pure-JAX f32 reference matching the PyTorch forward (eval mode)."""
    h = jnp.maximum(adj @ (x @ w1) + b1, 0.0)
    logits = adj @ (h @ w2) + b2
    return jax.nn.log_softmax(logits, axis=1)


def init_gcn_params(key, nfeat, nhid, nclass):
    """Mirrors GraphConvolution.reset_parameters: uniform(-stdv, stdv),
    stdv = 1/sqrt(out_features); biases are 1-D like the PyTorch module."""
    k1, k2, k3, k4 = jax.random.split(key, 4)
    stdv1 = 1.0 / math.sqrt(nhid)
    stdv2 = 1.0 / math.sqrt(nclass)
    w1 = jax.random.uniform(k1, (nfeat, nhid), jnp.float32, -stdv1, stdv1)
    b1 = jax.random.uniform(k2, (nhid,), jnp.float32, -stdv1, stdv1)
    w2 = jax.random.uniform(k3, (nhid, nclass), jnp.float32, -stdv2, stdv2)
    b2 = jax.random.uniform(k4, (nclass,), jnp.float32, -stdv2, stdv2)
    return w1, b1, w2, b2


if __name__ == "__main__":
    key = jax.random.PRNGKey(0)
    kx, kadj, kparams = jax.random.split(key, 3)

    # Small graph: 8 nodes, 32 input features, 32 hidden units, 16 classes.
    N, NFEAT, NHID, NCLASS = 8, 32, 32, 16

    x = jax.random.normal(kx, (N, NFEAT), jnp.float32)

    # Symmetric normalized adjacency D^-1/2 (A+I) D^-1/2, dense.
    a = (jax.random.uniform(kadj, (N, N)) < 0.3).astype(jnp.float32)
    a = jnp.maximum(a, a.T)
    a = a + jnp.eye(N, dtype=jnp.float32)
    deg = jnp.sum(a, axis=1)
    d_inv_sqrt = 1.0 / jnp.sqrt(deg)
    adj = a * d_inv_sqrt[:, None] * d_inv_sqrt[None, :]

    w1, b1, w2, b2 = init_gcn_params(kparams, NFEAT, NHID, NCLASS)

    out = gcn_forward(x, adj, w1, b1, w2, b2)
    jax.block_until_ready(out)

    # Sanity: shape, rows of log_softmax exp-sum to 1, matches f32 reference
    # within bf16 tolerance.
    assert out.shape == (N, NCLASS)
    row_sums = jnp.sum(jnp.exp(out), axis=1)
    assert jnp.allclose(row_sums, jnp.ones(N), atol=1e-4)
    ref = gcn_reference(x, adj, w1, b1, w2, b2)
    assert jnp.allclose(out, ref, atol=0.1), float(jnp.max(jnp.abs(out - ref)))

    print("KERNEL_OK")
</pallas_src>

<mosaic_0001>
module attributes {stable_mosaic.version = 11 : i64} {
  func.func @support1_kernel(%arg0: i32, %arg1: memref<8x128xbf16, #tpu.memory_space<vmem>>, %arg2: memref<128x128xbf16, #tpu.memory_space<vmem>>, %arg3: memref<8x128xbf16, #tpu.memory_space<vmem>>) attributes {dimension_semantics = [#tpu.dimension_semantics<parallel>], iteration_bounds = array<i64: 1>, scalar_prefetch = 0 : i64, scratch_operands = 0 : i64, tpu.core_type = #tpu.core_type<tc>, window_params = [{transform_indices = @transform_0, window_bounds = array<i64: 8, 128>}, {pipeline_mode = #tpu.pipeline_mode<synchronous>, transform_indices = @transform_1, window_bounds = array<i64: 128, 128>}, {transform_indices = @transform_2, window_bounds = array<i64: 8, 128>}]} {
    %c0 = arith.constant 0 : index
    %c0_0 = arith.constant 0 : index
    %0 = vector.load %arg1[%c0, %c0_0] : memref<8x128xbf16, #tpu.memory_space<vmem>>, vector<8x128xbf16>
    %c0_1 = arith.constant 0 : index
    %c0_2 = arith.constant 0 : index
    %1 = vector.load %arg2[%c0_1, %c0_2] : memref<128x128xbf16, #tpu.memory_space<vmem>>, vector<128x128xbf16>
    %cst = arith.constant dense<0.000000e+00> : vector<8x128xf32>
    %2 = tpu.matmul %0, %1, %cst {dimension_numbers = #tpu.dot_dimension_numbers<[1], [0], [0], [1], [0, 0, 1, 1], [], []>} : vector<8x128xbf16>, vector<128x128xbf16>, vector<8x128xf32> -> vector<8x128xf32>
    %3 = arith.truncf %2 : vector<8x128xf32> to vector<8x128xbf16>
    %c0_3 = arith.constant 0 : index
    %c0_4 = arith.constant 0 : index
    %4 = vector.load %arg3[%c0_3, %c0_4] : memref<8x128xbf16, #tpu.memory_space<vmem>>, vector<8x128xbf16>
    tpu.vector_store %arg3[%c0_3, %c0_4], %3 {strides = array<i32>} : memref<8x128xbf16, #tpu.memory_space<vmem>>, vector<8x128xbf16>,
    return
  }
  func.func @transform_0(%arg0: i32) -> (i32, i32) {
    %c0_i32 = arith.constant 0 : i32
    %c0_i32_0 = arith.constant 0 : i32
    return %arg0, %c0_i32 : i32, i32
  }
  func.func @transform_1(%arg0: i32) -> (i32, i32) {
    %c0_i32 = arith.constant 0 : i32
    %c0_i32_0 = arith.constant 0 : i32
    %c0_i32_1 = arith.constant 0 : i32
    return %c0_i32, %c0_i32_0 : i32, i32
  }
  func.func @transform_2(%arg0: i32) -> (i32, i32) {
    %c0_i32 = arith.constant 0 : i32
    %c0_i32_0 = arith.constant 0 : i32
    return %arg0, %c0_i32 : i32, i32
  }
}

module attributes {stable_mosaic.version = 11 : i64} {
  func.func @layer1_kernel(%arg0: i32, %arg1: i32, %arg2: memref<8x8xbf16, #tpu.memory_space<vmem>>, %arg3: memref<8x128xbf16, #tpu.memory_space<vmem>>, %arg4: memref<1x128xf32, #tpu.memory_space<vmem>>, %arg5: memref<128x128xbf16, #tpu.memory_space<vmem>>, %arg6: memref<8x128xbf16, #tpu.memory_space<vmem>>, %arg7: memref<8x128xf32, #tpu.memory_space<vmem>>) attributes {dimension_semantics = [#tpu.dimension_semantics<parallel>, #tpu.dimension_semantics<arbitrary>], iteration_bounds = array<i64: 1, 1>, scalar_prefetch = 0 : i64, scratch_operands = 1 : i64, tpu.core_type = #tpu.core_type<tc>, window_params = [{transform_indices = @transform_0, window_bounds = array<i64: 8, 8>}, {transform_indices = @transform_1, window_bounds = array<i64: 8, 128>}, {pipeline_mode = #tpu.pipeline_mode<synchronous>, transform_indices = @transform_2, window_bounds = array<i64: 1, 128>}, {pipeline_mode = #tpu.pipeline_mode<synchronous>, transform_indices = @transform_3, window_bounds = array<i64: 128, 128>}, {transform_indices = @transform_4, window_bounds = array<i64: 8, 128>}]} {
    %c0_i32 = arith.constant 0 : i32
    %0 = arith.cmpi eq, %arg1, %c0_i32 : i32
    %1 = arith.extui %0 : i1 to i32
    %c0_i32_0 = arith.constant 0 : i32
    %2 = arith.cmpi ne, %1, %c0_i32_0 : i32
    scf.if %2 {
      %cst_10 = arith.constant 0.000000e+00 : f32
      %12 = vector.broadcast %cst_10 : f32 to vector<8x128xf32>
      %c0_11 = arith.constant 0 : index
      %c0_12 = arith.constant 0 : index
      %13 = vector.load %arg7[%c0_11, %c0_12] : memref<8x128xf32, #tpu.memory_space<vmem>>, vector<8x128xf32>
      tpu.vector_store %arg7[%c0_11, %c0_12], %12 {strides = array<i32>} : memref<8x128xf32, #tpu.memory_space<vmem>>, vector<8x128xf32>,
    } else {
    }
    %c0 = arith.constant 0 : index
    %c0_1 = arith.constant 0 : index
    %3 = vector.load %arg7[%c0, %c0_1] : memref<8x128xf32, #tpu.memory_space<vmem>>, vector<8x128xf32>
    %c0_2 = arith.constant 0 : index
    %c0_3 = arith.constant 0 : index
    %4 = vector.load %arg2[%c0_2, %c0_3] : memref<8x8xbf16, #tpu.memory_space<vmem>>, vector<8x8xbf16>
    %c0_4 = arith.constant 0 : index
    %c0_5 = arith.constant 0 : index
    %5 = vector.load %arg3[%c0_4, %c0_5] : memref<8x128xbf16, #tpu.memory_space<vmem>>, vector<8x128xbf16>
    %cst = arith.constant dense<0.000000e+00> : vector<8x128xf32>
    %6 = tpu.matmul %4, %5, %cst {dimension_numbers = #tpu.dot_dimension_numbers<[1], [0], [0], [1], [0, 0, 1, 1], [], []>} : vector<8x8xbf16>, vector<8x128xbf16>, vector<8x128xf32> -> vector<8x128xf32>
    %7 = arith.addf %3, %6 : vector<8x128xf32>
    %c0_6 = arith.constant 0 : index
    %c0_7 = arith.constant 0 : index
    %8 = vector.load %arg7[%c0_6, %c0_7] : memref<8x128xf32, #tpu.memory_space<vmem>>, vector<8x128xf32>
    tpu.vector_store %arg7[%c0_6, %c0_7], %7 {strides = array<i32>} : memref<8x128xf32, #tpu.memory_space<vmem>>, vector<8x128xf32>,
    %c0_i32_8 = arith.constant 0 : i32
    %9 = arith.cmpi eq, %arg1, %c0_i32_8 : i32
    %10 = arith.extui %9 : i1 to i32
    %c0_i32_9 = arith.constant 0 : i32
    %11 = arith.cmpi ne, %10, %c0_i32_9 : i32
    scf.if %11 {
      %c0_10 = arith.constant 0 : index
      %c0_11 = arith.constant 0 : index
      %12 = vector.load %arg7[%c0_10, %c0_11] : memref<8x128xf32, #tpu.memory_space<vmem>>, vector<8x128xf32>
      %c0_12 = arith.constant 0 : index
      %c0_13 = arith.constant 0 : index
      %13 = vector.load %arg4[%c0_12, %c0_13] : memref<1x128xf32, #tpu.memory_space<vmem>>, vector<1x128xf32>
      %14 = vector.broadcast %13 : vector<1x128xf32> to vector<8x128xf32>
      %15 = arith.addf %12, %14 : vector<8x128xf32>
      %cst_14 = arith.constant 0.000000e+00 : f32
      %16 = vector.broadcast %cst_14 : f32 to vector<8x128xf32>
      %17 = arith.maximumf %15, %16 : vector<8x128xf32>
      %18 = arith.truncf %17 : vector<8x128xf32> to vector<8x128xbf16>
      %c0_15 = arith.constant 0 : index
      %c0_16 = arith.constant 0 : index
      %19 = vector.load %arg5[%c0_15, %c0_16] : memref<128x128xbf16, #tpu.memory_space<vmem>>, vector<128x128xbf16>
      %cst_17 = arith.constant dense<0.000000e+00> : vector<8x128xf32>
      %20 = tpu.matmul %18, %19, %cst_17 {dimension_numbers = #tpu.dot_dimension_numbers<[1], [0], [0], [1], [0, 0, 1, 1], [], []>} : vector<8x128xbf16>, vector<128x128xbf16>, vector<8x128xf32> -> vector<8x128xf32>
      %21 = arith.truncf %20 : vector<8x128xf32> to vector<8x128xbf16>
      %c0_18 = arith.constant 0 : index
      %c0_19 = arith.constant 0 : index
      %22 = vector.load %arg6[%c0_18, %c0_19] : memref<8x128xbf16, #tpu.memory_space<vmem>>, vector<8x128xbf16>
      tpu.vector_store %arg6[%c0_18, %c0_19], %21 {strides = array<i32>} : memref<8x128xbf16, #tpu.memory_space<vmem>>, vector<8x128xbf16>,
    } else {
    }
    return
  }
  func.func @transform_0(%arg0: i32, %arg1: i32) -> (i32, i32) {
    %c0_i32 = arith.constant 0 : i32
    return %arg0, %arg1 : i32, i32
  }
  func.func @transform_1(%arg0: i32, %arg1: i32) -> (i32, i32) {
    %c0_i32 = arith.constant 0 : i32
    %c0_i32_0 = arith.constant 0 : i32
    return %arg1, %c0_i32 : i32, i32
  }
  func.func @transform_2(%arg0: i32, %arg1: i32) -> (i32, i32) {
    %c0_i32 = arith.constant 0 : i32
    %c0_i32_0 = arith.constant 0 : i32
    %c0_i32_1 = arith.constant 0 : i32
    return %c0_i32, %c0_i32_0 : i32, i32
  }
  func.func @transform_3(%arg0: i32, %arg1: i32) -> (i32, i32) {
    %c0_i32 = arith.constant 0 : i32
    %c0_i32_0 = arith.constant 0 : i32
    %c0_i32_1 = arith.constant 0 : i32
    return %c0_i32, %c0_i32_0 : i32, i32
  }
  func.func @transform_4(%arg0: i32, %arg1: i32) -> (i32, i32) {
    %c0_i32 = arith.constant 0 : i32
    %c0_i32_0 = arith.constant 0 : i32
    return %arg0, %c0_i32 : i32, i32
  }
}

module attributes {stable_mosaic.version = 11 : i64} {
  func.func @layer2_kernel(%arg0: i32, %arg1: i32, %arg2: memref<8x8xbf16, #tpu.memory_space<vmem>>, %arg3: memref<8x128xbf16, #tpu.memory_space<vmem>>, %arg4: memref<1x128xf32, #tpu.memory_space<vmem>>, %arg5: memref<8x128xf32, #tpu.memory_space<vmem>>, %arg6: memref<8x128xf32, #tpu.memory_space<vmem>>) attributes {dimension_semantics = [#tpu.dimension_semantics<parallel>, #tpu.dimension_semantics<arbitrary>], iteration_bounds = array<i64: 1, 1>, scalar_prefetch = 0 : i64, scratch_operands = 1 : i64, tpu.core_type = #tpu.core_type<tc>, window_params = [{transform_indices = @transform_0, window_bounds = array<i64: 8, 8>}, {transform_indices = @transform_1, window_bounds = array<i64: 8, 128>}, {pipeline_mode = #tpu.pipeline_mode<synchronous>, transform_indices = @transform_2, window_bounds = array<i64: 1, 128>}, {transform_indices = @transform_3, window_bounds = array<i64: 8, 128>}]} {
    %c0_i32 = arith.constant 0 : i32
    %0 = arith.cmpi eq, %arg1, %c0_i32 : i32
    %1 = arith.extui %0 : i1 to i32
    %c0_i32_0 = arith.constant 0 : i32
    %2 = arith.cmpi ne, %1, %c0_i32_0 : i32
    scf.if %2 {
      %cst_10 = arith.constant 0.000000e+00 : f32
      %12 = vector.broadcast %cst_10 : f32 to vector<8x128xf32>
      %c0_11 = arith.constant 0 : index
      %c0_12 = arith.constant 0 : index
      %13 = vector.load %arg6[%c0_11, %c0_12] : memref<8x128xf32, #tpu.memory_space<vmem>>, vector<8x128xf32>
      tpu.vector_store %arg6[%c0_11, %c0_12], %12 {strides = array<i32>} : memref<8x128xf32, #tpu.memory_space<vmem>>, vector<8x128xf32>,
    } else {
    }
    %c0 = arith.constant 0 : index
    %c0_1 = arith.constant 0 : index
    %3 = vector.load %arg6[%c0, %c0_1] : memref<8x128xf32, #tpu.memory_space<vmem>>, vector<8x128xf32>
    %c0_2 = arith.constant 0 : index
    %c0_3 = arith.constant 0 : index
    %4 = vector.load %arg2[%c0_2, %c0_3] : memref<8x8xbf16, #tpu.memory_space<vmem>>, vector<8x8xbf16>
    %c0_4 = arith.constant 0 : index
    %c0_5 = arith.constant 0 : index
    %5 = vector.load %arg3[%c0_4, %c0_5] : memref<8x128xbf16, #tpu.memory_space<vmem>>, vector<8x128xbf16>
    %cst = arith.constant dense<0.000000e+00> : vector<8x128xf32>
    %6 = tpu.matmul %4, %5, %cst {dimension_numbers = #tpu.dot_dimension_numbers<[1], [0], [0], [1], [0, 0, 1, 1], [], []>} : vector<8x8xbf16>, vector<8x128xbf16>, vector<8x128xf32> -> vector<8x128xf32>
    %7 = arith.addf %3, %6 : vector<8x128xf32>
    %c0_6 = arith.constant 0 : index
    %c0_7 = arith.constant 0 : index
    %8 = vector.load %arg6[%c0_6, %c0_7] : memref<8x128xf32, #tpu.memory_space<vmem>>, vector<8x128xf32>
    tpu.vector_store %arg6[%c0_6, %c0_7], %7 {strides = array<i32>} : memref<8x128xf32, #tpu.memory_space<vmem>>, vector<8x128xf32>,
    %c0_i32_8 = arith.constant 0 : i32
    %9 = arith.cmpi eq, %arg1, %c0_i32_8 : i32
    %10 = arith.extui %9 : i1 to i32
    %c0_i32_9 = arith.constant 0 : i32
    %11 = arith.cmpi ne, %10, %c0_i32_9 : i32
    scf.if %11 {
      %c0_10 = arith.constant 0 : index
      %c0_11 = arith.constant 0 : index
      %12 = vector.load %arg6[%c0_10, %c0_11] : memref<8x128xf32, #tpu.memory_space<vmem>>, vector<8x128xf32>
      %c0_12 = arith.constant 0 : index
      %c0_13 = arith.constant 0 : index
      %13 = vector.load %arg4[%c0_12, %c0_13] : memref<1x128xf32, #tpu.memory_space<vmem>>, vector<1x128xf32>
      %14 = vector.broadcast %13 : vector<1x128xf32> to vector<8x128xf32>
      %15 = arith.addf %12, %14 : vector<8x128xf32>
      %16 = tpu.iota {dimensions = array<i32: 1>} : vector<8x128xi32>
      %c16_i32 = arith.constant 16 : i32
      %17 = vector.broadcast %c16_i32 : i32 to vector<8x128xi32>
      %18 = arith.cmpi slt, %16, %17 : vector<8x128xi32>
      %cst_14 = arith.constant -1.000000e+30 : f32
      %19 = vector.broadcast %cst_14 : f32 to vector<8x128xf32>
      %20 = arith.select %18, %15, %19 : vector<8x128xi1>, vector<8x128xf32>
      %cst_15 = arith.constant dense<0xFF800000> : vector<8xf32>
      %21 = vector.multi_reduction <maximumf>, %20, %cst_15 [1] : vector<8x128xf32> to vector<8xf32>
      %22 = vector.shape_cast %21 : vector<8xf32> to vector<8x1xf32>
      %23 = vector.broadcast %22 : vector<8x1xf32> to vector<8x128xf32>
      %24 = arith.subf %20, %23 : vector<8x128xf32>
      %25 = math.exp %24 : vector<8x128xf32>
      %cst_16 = arith.constant dense<0.000000e+00> : vector<8xf32>
      %26 = vector.multi_reduction <add>, %25, %cst_16 [1] : vector<8x128xf32> to vector<8xf32>
      %27 = vector.shape_cast %26 : vector<8xf32> to vector<8x1xf32>
      %28 = math.log %27 : vector<8x1xf32>
      %29 = vector.broadcast %28 : vector<8x1xf32> to vector<8x128xf32>
      %30 = arith.subf %24, %29 : vector<8x128xf32>
      %c0_17 = arith.constant 0 : index
      %c0_18 = arith.constant 0 : index
      %31 = vector.load %arg5[%c0_17, %c0_18] : memref<8x128xf32, #tpu.memory_space<vmem>>, vector<8x128xf32>
      tpu.vector_store %arg5[%c0_17, %c0_18], %30 {strides = array<i32>} : memref<8x128xf32, #tpu.memory_space<vmem>>, vector<8x128xf32>,
    } else {
    }
    return
  }
  func.func @transform_0(%arg0: i32, %arg1: i32) -> (i32, i32) {
    %c0_i32 = arith.constant 0 : i32
    return %arg0, %arg1 : i32, i32
  }
  func.func @transform_1(%arg0: i32, %arg1: i32) -> (i32, i32) {
    %c0_i32 = arith.constant 0 : i32
    %c0_i32_0 = arith.constant 0 : i32
    return %arg1, %c0_i32 : i32, i32
  }
  func.func @transform_2(%arg0: i32, %arg1: i32) -> (i32, i32) {
    %c0_i32 = arith.constant 0 : i32
    %c0_i32_0 = arith.constant 0 : i32
    %c0_i32_1 = arith.constant 0 : i32
    return %c0_i32, %c0_i32_0 : i32, i32
  }
  func.func @transform_3(%arg0: i32, %arg1: i32) -> (i32, i32) {
    %c0_i32 = arith.constant 0 : i32
    %c0_i32_0 = arith.constant 0 : i32
    return %arg0, %c0_i32 : i32, i32
  }
}

</mosaic_0001>

<llo_original>
// kernel: gcn_forward_prepared.3
$region0: #{gcn_forward_prepared.3}
  #allocation0 [shape = 'u32[]', space=smem, size = 0x4, offset = 0x4, fixed_abs, tag = 'smem constant byte address 0x4 - core index']
  #allocation1 [shape = 'u32[144,128]{1,0:T(1,128)}', space=vmem, size = 0x12000, scoped, tag = 'internal scratch']
  %s0 = inlined_call_operand.hbm [shape: bf16[8,128], index: 0, kind: input, shape index: {}]
  %s1 = inlined_call_operand.hbm [shape: bf16[128,128], index: 1, kind: input, shape index: {}]
  %s2 = inlined_call_operand.vmem [shape: bf16[8,128], index: 2, kind: output, shape index: {}]
  %s3 = sld [smem:[#allocation0]]
  $region26: #{gcn_forward_prepared.3} parent=0
    _
  %s5 = ssub.s32 1, %s3
  %s6 = scalar_select 0, %s5, %s3
  $region1: #{gcn_forward_prepared.3} parent=0
    #allocation2 [shape = 'u8[2048]{0}', space=vmem, size = 0x800, scoped, tag = 'input window, operand 0, single buffered']
    #allocation3 [shape = 's32[1]{0}', space=sflag, size = 0x4, scoped, tag = 'scoped memory for gcn_forward_prepared.3']
    #allocation4 [shape = 'u8[32768]{0}', space=vmem, size = 0x8000, scoped, tag = 'input window, operand 1, single buffered']
    #allocation5 [shape = 's32[1]{0}', space=sflag, size = 0x4, scoped, tag = 'scoped memory for gcn_forward_prepared.3']
    %7 = vsyncpa [#allocation3], 0
    %8 = vsyncpa [#allocation5], 0
    // Predicated region
    $region2: #{gcn_forward_prepared.3} parent=1 // pred_check
      _
    $region3: #{gcn_forward_prepared.3} parent=1 // pred_check_branch
      %10 = sbr.rel (0) target = $region5
    $region4: #{gcn_forward_prepared.3} parent=1 // pred_region
      %s12 = ssub.s32 64, 64
      %13 = vsyncadd [#allocation3], %s12
      %s15 = sshll.u32 [#allocation2], 4
      %s16 = int_to_ptr.vmem [resolvable:$true] %s15
      %18 = dma.hbm_to_vmem [thread:$0]  %s0, 64, %s16, [#allocation3]
    $region5: #{gcn_forward_prepared.3} parent=1 // pred_fallthru
      _
    // Predicated region
    $region6: #{gcn_forward_prepared.3} parent=1 // pred_check
      _
    $region7: #{gcn_forward_prepared.3} parent=1 // pred_check_branch
      %20 = sbr.rel (0) target = $region9
    $region8: #{gcn_forward_prepared.3} parent=1 // pred_region
      %s22 = ssub.s32 1024, 1024
      %23 = vsyncadd [#allocation5], %s22
      %s24 = sshll.u32 [#allocation4], 4
      %s25 = int_to_ptr.vmem [resolvable:$true] %s24
      %30 = dma.hbm_to_vmem [thread:$0]  %s1, 1024, %s25, [#allocation5], 64, 64, 4
    $region9: #{gcn_forward_prepared.3} parent=1 // pred_fallthru
      _
    // Predicated region
    $region10: #{gcn_forward_prepared.3} parent=1 // pred_check
      _
    $region11: #{gcn_forward_prepared.3} parent=1 // pred_check_branch
      %32 = sbr.rel (0) target = $region13
    $region12: #{gcn_forward_prepared.3} parent=1 // pred_region
      %33 = dma.done [#allocation3], 64
    $region13: #{gcn_forward_prepared.3} parent=1 // pred_fallthru
      _
    // Predicated region
    $region14: #{gcn_forward_prepared.3} parent=1 // pred_check
      _
    $region15: #{gcn_forward_prepared.3} parent=1 // pred_check_branch
      %35 = sbr.rel (0) target = $region17
    $region16: #{gcn_forward_prepared.3} parent=1 // pred_region
      %36 = dma.done [#allocation5], 1024
    $region17: #{gcn_forward_prepared.3} parent=1 // pred_fallthru
      _
    %v38 = vld [vmem:[#allocation2] sm:$0xf]
    %v39 = vld [vmem:[#allocation4] sm:$0xf]
    %v40 = vld [vmem:[#allocation4 + $0x4] sm:$0xf]
    %v41 = vld [vmem:[#allocation4 + $0x8] sm:$0xf]
    %v42 = vld [vmem:[#allocation4 + $0xc] sm:$0xf]
    %v43 = vld [vmem:[#allocation4 + $0x10] sm:$0xf]
    %v44 = vld [vmem:[#allocation4 + $0x14] sm:$0xf]
    %v45 = vld [vmem:[#allocation4 + $0x18] sm:$0xf]
    %v46 = vld [vmem:[#allocation4 + $0x1c] sm:$0xf]
    %v47 = vld [vmem:[#allocation4 + $0x20] sm:$0xf]
    %v48 = vld [vmem:[#allocation4 + $0x24] sm:$0xf]
    %v49 = vld [vmem:[#allocation4 + $0x28] sm:$0xf]
    %v50 = vld [vmem:[#allocation4 + $0x2c] sm:$0xf]
    %v51 = vld [vmem:[#allocation4 + $0x30] sm:$0xf]
    %v52 = vld [vmem:[#allocation4 + $0x34] sm:$0xf]
    %v53 = vld [vmem:[#allocation4 + $0x38] sm:$0xf]
    %v54 = vld [vmem:[#allocation4 + $0x3c] sm:$0xf]
    %v71 = vunpack.c.l.b16 %v39
    %v72 = vunpack.c.l.b16 %v40
    %v73 = vunpack.c.l.b16 %v41
    %v74 = vunpack.c.l.b16 %v42
    %v75 = vunpack.c.l.b16 %v43
    %v76 = vunpack.c.l.b16 %v44
    %v77 = vunpack.c.l.b16 %v45
    %v78 = vunpack.c.l.b16 %v46
    %v79 = vunpack.c.l.b16 %v47
    %v80 = vunpack.c.l.b16 %v48
    %v81 = vunpack.c.l.b16 %v49
    %v82 = vunpack.c.l.b16 %v50
    %v83 = vunpack.c.l.b16 %v51
    %v84 = vunpack.c.l.b16 %v52
    %v85 = vunpack.c.l.b16 %v53
    %v86 = vunpack.c.l.b16 %v54
    %v87 = vpack.c.b16 %v72, %v71
    %v88 = vpack.c.b16 %v74, %v73
    %v89 = vpack.c.b16 %v76, %v75
    %v90 = vpack.c.b16 %v78, %v77
    %v91 = vpack.c.b16 %v80, %v79
    %v92 = vpack.c.b16 %v82, %v81
    %v93 = vpack.c.b16 %v84, %v83
    %v94 = vpack.c.b16 %v86, %v85
    %103 = vmatprep.subr.bf16.mxu0 0
    %104 = vmatpush1.bf16.msra.mxu0 %v94
    %105 = vmatprep.subr.bf16.mxu0 0
    %106 = vmatpush1.bf16.msra.mxu0 %v93
    %107 = vmatprep.subr.bf16.mxu0 0
    %108 = vmatpush1.bf16.msra.mxu0 %v92
    %109 = vmatprep.subr.bf16.mxu0 0
    %110 = vmatpush1.bf16.msra.mxu0 %v91
    %111 = vmatprep.subr.bf16.mxu0 0
    %112 = vmatpush1.bf16.msra.mxu0 %v90
    %113 = vmatprep.subr.bf16.mxu0 0
    %114 = vmatpush1.bf16.msra.mxu0 %v89
    %115 = vmatprep.subr.bf16.mxu0 0
    %116 = vmatpush1.bf16.msra.mxu0 %v88
    %117 = vmatprep.subr.bf16.mxu0 0
    %118 = vmatpush1.bf16.msra.mxu0 %v87
    %119 = vmatprep.subr.bf16.mxu0 0
    %120 = vmatpush2.bf16.msra.mxu0 0
    %121 = vmatprep.subr.bf16.mxu0 0
    %122 = vmatpush2.bf16.msra.mxu0 0
    %123 = vmatprep.subr.bf16.mxu0 0
    %124 = vmatpush2.bf16.msra.mxu0 0
    %125 = vmatprep.subr.bf16.mxu0 0
    %126 = vmatpush2.bf16.msra.mxu0 0
    %127 = vmatprep.subr.bf16.mxu0 0
    %128 = vmatpush2.bf16.msra.mxu0 0
    %129 = vmatprep.subr.bf16.mxu0 0
    %130 = vmatpush2.bf16.msra.mxu0 0
    %131 = vmatprep.subr.bf16.mxu0 0
    %132 = vmatpush2.bf16.msra.mxu0 0
    %133 = vmatprep.subr.bf16.mxu0 0
    %134 = vmatpush2.bf16.msra.mxu0 0
    %135 = vmatprep.mubr.bf16.mxu0 0
    %136 = vmatmul.mubr.bf16.gmra.mxu0 %v38
    %v137 = vpop.f32.mrf.mxu0
    %v138 = vadd.f32 0.0, %v137
    %v139 = vpop.f32.mrf.mxu0
    %v140 = vpop.f32.mrf.mxu0
    %v141 = vpop.f32.mrf.mxu0
    %142 = vdwg.mxu0
    %v143 = vpack.c.bf16 %v138, %v138
    %144 = vst [vmem:[%s2] sm:$0xf] %v143
    // Predicated region
    $region18: #{gcn_forward_prepared.3} parent=1 // pred_check
      _
    $region19: #{gcn_forward_prepared.3} parent=1 // pred_check_branch
      %146 = sbr.rel (0) target = $region21
    $region20: #{gcn_forward_prepared.3} parent=1 // pred_region
      _
    $region21: #{gcn_forward_prepared.3} parent=1 // pred_fallthru
      _
    // Predicated region
    $region22: #{gcn_forward_prepared.3} parent=1 // pred_check
      _
    $region23: #{gcn_forward_prepared.3} parent=1 // pred_check_branch
      %148 = sbr.rel (0) target = $region25
    $region24: #{gcn_forward_prepared.3} parent=1 // pred_region
      _
    $region25: #{gcn_forward_prepared.3} parent=1 // pred_fallthru
      _
    %149 = vsyncpa [#allocation3], 1
    %150 = vsyncpa [#allocation5], 1

// kernel: gcn_forward_prepared.4
$region0: #{gcn_forward_prepared.4}
  #allocation0 [shape = 'u32[]', space=smem, size = 0x4, offset = 0x4, fixed_abs, tag = 'smem constant byte address 0x4 - core index']
  #allocation1 [shape = 'u32[144,128]{1,0:T(1,128)}', space=vmem, size = 0x12000, scoped, tag = 'internal scratch']
  #allocation2 [shape = 'f32[8,128]{1,0:T(8,128)}', space=vmem, size = 0x1000, scoped, tag = 'scratch operand']
  %s0 = inlined_call_operand.vmem [shape: bf16[8,8], index: 0, kind: input, shape index: {}]
  %s1 = inlined_call_operand.vmem [shape: bf16[8,128], index: 1, kind: input, shape index: {}]
  %s2 = inlined_call_operand.vmem [shape: f32[1,128], index: 2, kind: input, shape index: {}]
  %s3 = inlined_call_operand.vmem [shape: bf16[128,128], index: 3, kind: input, shape index: {}]
  %s4 = inlined_call_operand.vmem [shape: bf16[8,128], index: 4, kind: output, shape index: {}]
  %s5 = sld [smem:[#allocation0]]
  $region34: #{gcn_forward_prepared.4} parent=0
    _
  %s7 = ssub.s32 1, %s5
  %s8 = scalar_select 0, %s7, %s5
  // Predicated region
  $region2: #{gcn_forward_prepared.4} parent=0 // pred_check
    _
  $region3: #{gcn_forward_prepared.4} parent=0 // pred_check_branch
    %10 = sbr.rel (0) target = $region5
  $region4: #{gcn_forward_prepared.4} parent=0 // pred_region
    _
  $region5: #{gcn_forward_prepared.4} parent=0 // pred_fallthru
    _
  // Predicated region
  $region6: #{gcn_forward_prepared.4} parent=0 // pred_check
    _
  $region7: #{gcn_forward_prepared.4} parent=0 // pred_check_branch
    %12 = sbr.rel (0) target = $region9
  $region8: #{gcn_forward_prepared.4} parent=0 // pred_region
    _
  $region9: #{gcn_forward_prepared.4} parent=0 // pred_fallthru
    _
  // Predicated region
  $region10: #{gcn_forward_prepared.4} parent=0 // pred_check
    _
  $region11: #{gcn_forward_prepared.4} parent=0 // pred_check_branch
    %14 = sbr.rel (0) target = $region13
  $region12: #{gcn_forward_prepared.4} parent=0 // pred_region
    _
  $region13: #{gcn_forward_prepared.4} parent=0 // pred_fallthru
    _
  // Predicated region
  $region14: #{gcn_forward_prepared.4} parent=0 // pred_check
    _
  $region15: #{gcn_forward_prepared.4} parent=0 // pred_check_branch
    %16 = sbr.rel (0) target = $region17
  $region16: #{gcn_forward_prepared.4} parent=0 // pred_region
    _
  $region17: #{gcn_forward_prepared.4} parent=0 // pred_fallthru
    _
  %p18 = scmp.eq.s32.totalorder 0, 0
  // Predicated region
  $region18: #{gcn_forward_prepared.4} parent=0 // pred_check
    %p19 = pneg %p18
  $region19: #{gcn_forward_prepared.4} parent=0 // pred_check_branch
    %21 = sbr.rel (%p19) target = $region21
  $region20: #{gcn_forward_prepared.4} parent=0 // pred_region
    %22 = vst [vmem:[#allocation2] sm:$0xff] 0.0
  $region21: #{gcn_forward_prepared.4} parent=0 // pred_fallthru
    _
  %v23 = vld [vmem:[#allocation2] sm:$0xff]
  %v24 = vld [vmem:[%s0] sm:$0xf]
  %v25 = vld [vmem:[%s1] sm:$0xf]
  %vm26 = vcmask 64512
  %v28 = vsel %vm26, %v24, 0
  %vm30 = vcmask 1043456
  %v32 = vsel %vm30, %v25, 0
  %34 = vmatprep.subr.bf16.mxu0 0
  %35 = vmatpush1.bf16.msra.mxu0 0
  %36 = vmatprep.subr.bf16.mxu0 0
  %37 = vmatpush1.bf16.msra.mxu0 0
  %38 = vmatprep.subr.bf16.mxu0 0
  %39 = vmatpush1.bf16.msra.mxu0 0
  %40 = vmatprep.subr.bf16.mxu0 0
  %41 = vmatpush1.bf16.msra.mxu0 0
  %42 = vmatprep.subr.bf16.mxu0 0
  %43 = vmatpush1.bf16.msra.mxu0 0
  %44 = vmatprep.subr.bf16.mxu0 0
  %45 = vmatpush1.bf16.msra.mxu0 0
  %46 = vmatprep.subr.bf16.mxu0 0
  %47 = vmatpush1.bf16.msra.mxu0 0
  %48 = vmatprep.subr.bf16.mxu0 0
  %49 = vmatpush1.bf16.msra.mxu0 %v32
  %50 = vmatprep.subr.bf16.mxu0 0
  %51 = vmatpush2.bf16.msra.mxu0 0
  %52 = vmatprep.subr.bf16.mxu0 0
  %53 = vmatpush2.bf16.msra.mxu0 0
  %54 = vmatprep.subr.bf16.mxu0 0
  %55 = vmatpush2.bf16.msra.mxu0 0
  %56 = vmatprep.subr.bf16.mxu0 0
  %57 = vmatpush2.bf16.msra.mxu0 0
  %58 = vmatprep.subr.bf16.mxu0 0
  %59 = vmatpush2.bf16.msra.mxu0 0
  %60 = vmatprep.subr.bf16.mxu0 0
  %61 = vmatpush2.bf16.msra.mxu0 0
  %62 = vmatprep.subr.bf16.mxu0 0
  %63 = vmatpush2.bf16.msra.mxu0 0
  %64 = vmatprep.subr.bf16.mxu0 0
  %65 = vmatpush2.bf16.msra.mxu0 0
  %66 = vmatprep.mubr.bf16.mxu0 0
  %67 = vmatmul.mubr.bf16.gmra.mxu0 %v28
  %v68 = vpop.f32.mrf.mxu0
  %v69 = vadd.f32 0.0, %v68
  %v70 = vpop.f32.mrf.mxu0
  %v71 = vpop.f32.mrf.mxu0
  %v72 = vpop.f32.mrf.mxu0
  %73 = vdwg.mxu0
  %v74 = vadd.f32 %v23, %v69
  %75 = vst [vmem:[#allocation2] sm:$0xff] %v74
  // Predicated region
  $region22: #{gcn_forward_prepared.4} parent=0 // pred_check
    %p76 = pneg %p18
  $region23: #{gcn_forward_prepared.4} parent=0 // pred_check_branch
    %78 = sbr.rel (%p76) target = $region25
  $region24: #{gcn_forward_prepared.4} parent=0 // pred_region
    %v79 = vld [vmem:[#allocation2] sm:$0xff]
    %v80 = vld [vmem:[%s2] sm:$0x1]
    %v82 = vlaneseq
    %v83 = vshrl.u32 %v82, 7
    %v84 = vsub.s32 0, %v83
    %v85 = vrot.slane %v80, %v84
    %v87 = vadd.f32 %v79, %v85
    %v88 = vmax.f32 %v87, 0.0
    %v89 = vpack.c.bf16 %v88, %v88
    %v90 = vld [vmem:[%s3] sm:$0xf]
    %v91 = vld [vmem:[%s3 + $0x4] sm:$0xf]
    %v92 = vld [vmem:[%s3 + $0x8] sm:$0xf]
    %v93 = vld [vmem:[%s3 + $0xc] sm:$0xf]
    %v94 = vld [vmem:[%s3 + $0x10] sm:$0xf]
    %v95 = vld [vmem:[%s3 + $0x14] sm:$0xf]
    %v96 = vld [vmem:[%s3 + $0x18] sm:$0xf]
    %v97 = vld [vmem:[%s3 + $0x1c] sm:$0xf]
    %v98 = vld [vmem:[%s3 + $0x20] sm:$0xf]
    %v99 = vld [vmem:[%s3 + $0x24] sm:$0xf]
    %v100 = vld [vmem:[%s3 + $0x28] sm:$0xf]
    %v101 = vld [vmem:[%s3 + $0x2c] sm:$0xf]
    %v102 = vld [vmem:[%s3 + $0x30] sm:$0xf]
    %v103 = vld [vmem:[%s3 + $0x34] sm:$0xf]
    %v104 = vld [vmem:[%s3 + $0x38] sm:$0xf]
    %v105 = vld [vmem:[%s3 + $0x3c] sm:$0xf]
    %v122 = vunpack.c.l.b16 %v90
    %v123 = vunpack.c.l.b16 %v91
    %v124 = vunpack.c.l.b16 %v92
    %v125 = vunpack.c.l.b16 %v93
    %v126 = vunpack.c.l.b16 %v94
    %v127 = vunpack.c.l.b16 %v95
    %v128 = vunpack.c.l.b16 %v96
    %v129 = vunpack.c.l.b16 %v97
    %v130 = vunpack.c.l.b16 %v98
    %v131 = vunpack.c.l.b16 %v99
    %v132 = vunpack.c.l.b16 %v100
    %v133 = vunpack.c.l.b16 %v101
    %v134 = vunpack.c.l.b16 %v102
    %v135 = vunpack.c.l.b16 %v103
    %v136 = vunpack.c.l.b16 %v104
    %v137 = vunpack.c.l.b16 %v105
    %v138 = vpack.c.b16 %v123, %v122
    %v139 = vpack.c.b16 %v125, %v124
    %v140 = vpack.c.b16 %v127, %v126
    %v141 = vpack.c.b16 %v129, %v128
    %v142 = vpack.c.b16 %v131, %v130
    %v143 = vpack.c.b16 %v133, %v132
    %v144 = vpack.c.b16 %v135, %v134
    %v145 = vpack.c.b16 %v137, %v136
    %154 = vmatprep.subr.bf16.mxu0 0
    %155 = vmatpush1.bf16.msra.mxu0 %v145
    %156 = vmatprep.subr.bf16.mxu0 0
    %157 = vmatpush1.bf16.msra.mxu0 %v144
    %158 = vmatprep.subr.bf16.mxu0 0
    %159 = vmatpush1.bf16.msra.mxu0 %v143
    %160 = vmatprep.subr.bf16.mxu0 0
    %161 = vmatpush1.bf16.msra.mxu0 %v142
    %162 = vmatprep.subr.bf16.mxu0 0
    %163 = vmatpush1.bf16.msra.mxu0 %v141
    %164 = vmatprep.subr.bf16.mxu0 0
    %165 = vmatpush1.bf16.msra.mxu0 %v140
    %166 = vmatprep.subr.bf16.mxu0 0
    %167 = vmatpush1.bf16.msra.mxu0 %v139
    %168 = vmatprep.subr.bf16.mxu0 0
    %169 = vmatpush1.bf16.msra.mxu0 %v138
    %170 = vmatprep.subr.bf16.mxu0 0
    %171 = vmatpush2.bf16.msra.mxu0 0
    %172 = vmatprep.subr.bf16.mxu0 0
    %173 = vmatpush2.bf16.msra.mxu0 0
    %174 = vmatprep.subr.bf16.mxu0 0
    %175 = vmatpush2.bf16.msra.mxu0 0
    %176 = vmatprep.subr.bf16.mxu0 0
    %177 = vmatpush2.bf16.msra.mxu0 0
    %178 = vmatprep.subr.bf16.mxu0 0
    %179 = vmatpush2.bf16.msra.mxu0 0
    %180 = vmatprep.subr.bf16.mxu0 0
    %181 = vmatpush2.bf16.msra.mxu0 0
    %182 = vmatprep.subr.bf16.mxu0 0
    %183 = vmatpush2.bf16.msra.mxu0 0
    %184 = vmatprep.subr.bf16.mxu0 0
    %185 = vmatpush2.bf16.msra.mxu0 0
    %186 = vmatprep.mubr.bf16.mxu0 0
    %187 = vmatmul.mubr.bf16.gmra.mxu0 %v89
    %v188 = vpop.f32.mrf.mxu0
    %v189 = vadd.f32 0.0, %v188
    %v190 = vpop.f32.mrf.mxu0
    %v191 = vpop.f32.mrf.mxu0
    %v192 = vpop.f32.mrf.mxu0
    %193 = vdwg.mxu0
    %v194 = vpack.c.bf16 %v189, %v189
    %195 = vst [vmem:[%s4] sm:$0xf] %v194
  $region25: #{gcn_forward_prepared.4} parent=0 // pred_fallthru
    _
  // Predicated region
  $region26: #{gcn_forward_prepared.4} parent=0 // pred_check
    _
  $region27: #{gcn_forward_prepared.4} parent=0 // pred_check_branch
    %197 = sbr.rel (0) target = $region29
  $region28: #{gcn_forward_prepared.4} parent=0 // pred_region
    _
  $region29: #{gcn_forward_prepared.4} parent=0 // pred_fallthru
    _
  // Predicated region
  $region30: #{gcn_forward_prepared.4} parent=0 // pred_check
    _
  $region31: #{gcn_forward_prepared.4} parent=0 // pred_check_branch
    %199 = sbr.rel (0) target = $region33
  $region32: #{gcn_forward_prepared.4} parent=0 // pred_region
    _
  $region33: #{gcn_forward_prepared.4} parent=0 // pred_fallthru
    _

// kernel: gcn_forward_prepared.5
$region0: #{gcn_forward_prepared.5}
  #allocation0 [shape = 'u32[]', space=smem, size = 0x4, offset = 0x4, fixed_abs, tag = 'smem constant byte address 0x4 - core index']
  #allocation1 [shape = 'u32[144,128]{1,0:T(1,128)}', space=vmem, size = 0x12000, scoped, tag = 'internal scratch']
  #allocation2 [shape = 'f32[8,128]{1,0:T(8,128)}', space=vmem, size = 0x1000, scoped, tag = 'scratch operand']
  %s0 = inlined_call_operand.vmem [shape: bf16[8,8], index: 0, kind: input, shape index: {}]
  %s1 = inlined_call_operand.vmem [shape: bf16[8,128], index: 1, kind: input, shape index: {}]
  %s2 = inlined_call_operand.vmem [shape: f32[1,128], index: 2, kind: input, shape index: {}]
  %s3 = inlined_call_operand.hbm [shape: f32[8,128], index: 3, kind: output, shape index: {}]
  %s4 = sld [smem:[#allocation0]]
  $region30: #{gcn_forward_prepared.5} parent=0
    _
  %s6 = ssub.s32 1, %s4
  %s7 = scalar_select 0, %s6, %s4
  $region1: #{gcn_forward_prepared.5} parent=0
    #allocation3 [shape = 'u8[4096]{0}', space=vmem, size = 0x1000, scoped, tag = 'output window, operand 0, single buffered']
    #allocation4 [shape = 's32[1]{0}', space=sflag, size = 0x4, scoped, tag = 'scoped memory for gcn_forward_prepared.5']
    %8 = vsyncpa [#allocation4], 0
    // Predicated region
    $region2: #{gcn_forward_prepared.5} parent=1 // pred_check
      _
    $region3: #{gcn_forward_prepared.5} parent=1 // pred_check_branch
      %10 = sbr.rel (0) target = $region5
    $region4: #{gcn_forward_prepared.5} parent=1 // pred_region
      _
    $region5: #{gcn_forward_prepared.5} parent=1 // pred_fallthru
      _
    // Predicated region
    $region6: #{gcn_forward_prepared.5} parent=1 // pred_check
      _
    $region7: #{gcn_forward_prepared.5} parent=1 // pred_check_branch
      %12 = sbr.rel (0) target = $region9
    $region8: #{gcn_forward_prepared.5} parent=1 // pred_region
      _
    $region9: #{gcn_forward_prepared.5} parent=1 // pred_fallthru
      _
    // Predicated region
    $region10: #{gcn_forward_prepared.5} parent=1 // pred_check
      _
    $region11: #{gcn_forward_prepared.5} parent=1 // pred_check_branch
      %14 = sbr.rel (0) target = $region13
    $region12: #{gcn_forward_prepared.5} parent=1 // pred_region
      _
    $region13: #{gcn_forward_prepared.5} parent=1 // pred_fallthru
      _
    %p16 = scmp.eq.s32.totalorder 0, 0
    // Predicated region
    $region14: #{gcn_forward_prepared.5} parent=1 // pred_check
      %p17 = pneg %p16
    $region15: #{gcn_forward_prepared.5} parent=1 // pred_check_branch
      %19 = sbr.rel (%p17) target = $region17
    $region16: #{gcn_forward_prepared.5} parent=1 // pred_region
      %20 = vst [vmem:[#allocation2] sm:$0xff] 0.0
    $region17: #{gcn_forward_prepared.5} parent=1 // pred_fallthru
      _
    %v21 = vld [vmem:[#allocation2] sm:$0xff]
    %v22 = vld [vmem:[%s0] sm:$0xf]
    %v23 = vld [vmem:[%s1] sm:$0xf]
    %vm24 = vcmask 64512
    %v26 = vsel %vm24, %v22, 0
    %vm28 = vcmask 1043456
    %v30 = vsel %vm28, %v23, 0
    %32 = vmatprep.subr.bf16.mxu0 0
    %33 = vmatpush1.bf16.msra.mxu0 0
    %34 = vmatprep.subr.bf16.mxu0 0
    %35 = vmatpush1.bf16.msra.mxu0 0
    %36 = vmatprep.subr.bf16.mxu0 0
    %37 = vmatpush1.bf16.msra.mxu0 0
    %38 = vmatprep.subr.bf16.mxu0 0
    %39 = vmatpush1.bf16.msra.mxu0 0
    %40 = vmatprep.subr.bf16.mxu0 0
    %41 = vmatpush1.bf16.msra.mxu0 0
    %42 = vmatprep.subr.bf16.mxu0 0
    %43 = vmatpush1.bf16.msra.mxu0 0
    %44 = vmatprep.subr.bf16.mxu0 0
    %45 = vmatpush1.bf16.msra.mxu0 0
    %46 = vmatprep.subr.bf16.mxu0 0
    %47 = vmatpush1.bf16.msra.mxu0 %v30
    %48 = vmatprep.subr.bf16.mxu0 0
    %49 = vmatpush2.bf16.msra.mxu0 0
    %50 = vmatprep.subr.bf16.mxu0 0
    %51 = vmatpush2.bf16.msra.mxu0 0
    %52 = vmatprep.subr.bf16.mxu0 0
    %53 = vmatpush2.bf16.msra.mxu0 0
    %54 = vmatprep.subr.bf16.mxu0 0
    %55 = vmatpush2.bf16.msra.mxu0 0
    %56 = vmatprep.subr.bf16.mxu0 0
    %57 = vmatpush2.bf16.msra.mxu0 0
    %58 = vmatprep.subr.bf16.mxu0 0
    %59 = vmatpush2.bf16.msra.mxu0 0
    %60 = vmatprep.subr.bf16.mxu0 0
    %61 = vmatpush2.bf16.msra.mxu0 0
    %62 = vmatprep.subr.bf16.mxu0 0
    %63 = vmatpush2.bf16.msra.mxu0 0
    %64 = vmatprep.mubr.bf16.mxu0 0
    %65 = vmatmul.mubr.bf16.gmra.mxu0 %v26
    %v66 = vpop.f32.mrf.mxu0
    %v67 = vadd.f32 0.0, %v66
    %v68 = vpop.f32.mrf.mxu0
    %v69 = vpop.f32.mrf.mxu0
    %v70 = vpop.f32.mrf.mxu0
    %71 = vdwg.mxu0
    %v72 = vadd.f32 %v21, %v67
    %73 = vst [vmem:[#allocation2] sm:$0xff] %v72
    // Predicated region
    $region18: #{gcn_forward_prepared.5} parent=1 // pred_check
      %p74 = pneg %p16
    $region19: #{gcn_forward_prepared.5} parent=1 // pred_check_branch
      %76 = sbr.rel (%p74) target = $region21
    $region20: #{gcn_forward_prepared.5} parent=1 // pred_region
      %v77 = vld [vmem:[#allocation2] sm:$0xff]
      %v78 = vld [vmem:[%s2] sm:$0x1]
      %v80 = vlaneseq
      %v81 = vshrl.u32 %v80, 7
      %v82 = vsub.s32 0, %v81
      %v83 = vrot.slane %v78, %v82
      %v85 = vadd.f32 %v77, %v83
      %v86 = vlaneseq
      %v87 = vand.u32 %v86, 127
      %vm88 = vcmp.lt.s32.totalorder %v87, 16
      %v89 = vsel %vm88, %v85, -1e+30
      %90 = vmax.xlane.f32.xlu0 %v89
      %v91 = vpop.xlane.xlu0 %90
      %v92 = vsub.f32 %v89, %v91
      %v93 = vmul.f32 %v92, 1.442695
      %v94 = vpow.pop %v93
      %95 = vadd.xlane.f32.xlu0 %v94
      %v96 = vpop.xlane.xlu0 %95
      %v97 = vlog2.pop %v96
      %v98 = vmul.f32 %v97, 0.6931472
      %v99 = vsub.f32 %v92, %v98
      %100 = vst [vmem:[#allocation3] sm:$0xff] %v99
    $region21: #{gcn_forward_prepared.5} parent=1 // pred_fallthru
      _
    // Predicated region
    $region22: #{gcn_forward_prepared.5} parent=1 // pred_check
      _
    $region23: #{gcn_forward_prepared.5} parent=1 // pred_check_branch
      %102 = sbr.rel (0) target = $region25
    $region24: #{gcn_forward_prepared.5} parent=1 // pred_region
      %s104 = ssub.s32 128, 128
      %105 = vsyncadd [#allocation4], %s104
      %s107 = sshll.u32 [#allocation3], 4
      %s108 = int_to_ptr.vmem [resolvable:$true] %s107
      %110 = dma.vmem_to_hbm [thread:$0]  %s108, 128, %s3, [#allocation4]
    $region25: #{gcn_forward_prepared.5} parent=1 // pred_fallthru
      _
    // Predicated region
    $region26: #{gcn_forward_prepared.5} parent=1 // pred_check
      _
    $region27: #{gcn_forward_prepared.5} parent=1 // pred_check_branch
      %112 = sbr.rel (0) target = $region29
    $region28: #{gcn_forward_prepared.5} parent=1 // pred_region
      %113 = dma.done [#allocation4], 128
    $region29: #{gcn_forward_prepared.5} parent=1 // pred_fallthru
      _
    %114 = vsyncpa [#allocation4], 1

</llo_original>
